<compile_context>
chip_gen: v5e
topology: v5e:2x2
jax: 0.10.0
libtpu: 0.0.40
codegen_flags: <defaults>
</compile_context>

<pallas_src>
import jax
import jax.numpy as jnp
from jax.experimental import pallas as pl
from jax.experimental.pallas import tpu as pltpu


def _round_up(x: int, m: int) -> int:
    return ((x + m - 1) // m) * m


def _make_mlp_kernel(emb_dims, compute_dtype):
    num_emb = len(emb_dims)

    def kernel(*refs):
        emb_refs = refs[:num_emb]
        w1_ref, b1_ref, w2_ref, b2_ref, o_ref = refs[num_emb:]

        # Fused concat + first Linear: sum of partial matmuls against static
        # row-slices of the VMEM-resident W1.  f32 accumulation on the MXU.
        # NOTE: emb_dims must keep W1 row-slices sublane-pack aligned for
        # sub-32-bit weights (true here: multiples of 32).
        h = None
        off = 0
        for r, ed in zip(emb_refs, emb_dims):
            part = jnp.dot(r[...].astype(compute_dtype),
                           w1_ref[off:off + ed, :],
                           preferred_element_type=jnp.float32)
            h = part if h is None else h + part
            off += ed

        h = h + b1_ref[...]
        h = jnp.where(h > 0, h, 0.01 * h)          # LeakyReLU(negative_slope=0.01)

        # Second Linear.  The astype is a no-op in the pure-f32 configuration.
        out = jnp.dot(h.astype(compute_dtype), w2_ref[...],
                      preferred_element_type=jnp.float32)
        out = out + b2_ref[...]
        o_ref[...] = out.astype(o_ref.dtype)

    return kernel


def mlp_forward(node_embeddings, w1, b1, w2, b2, *,
                tile_n=1024, use_bf16=True, out_dtype=None):
    """node_embeddings: list of (N, emb_size_i) arrays. Returns (N, output_size).

    Pass bf16 node_embeddings (and leave out_dtype=None) to get the bf16-I/O
    fast path; do NOT up/down-cast activations in the caller just for this
    kernel — that adds an extra HBM pass.
    """
    num_emb = len(node_embeddings)
    n = int(node_embeddings[0].shape[0])
    emb_dims = [int(e.shape[1]) for e in node_embeddings]
    d = sum(emb_dims)
    d_out = int(w2.shape[1])
    assert w1.shape == (d, d), (w1.shape, d)
    assert w2.shape == (d, d_out), (w2.shape, d, d_out)
    b1 = jnp.asarray(b1).reshape(1, d).astype(jnp.float32)      # accept (d,) or (1, d)
    b2 = jnp.asarray(b2).reshape(1, d_out).astype(jnp.float32)

    in_dtype = node_embeddings[0].dtype
    if out_dtype is None:
        out_dtype = in_dtype          # bf16 in -> bf16 out halves both HBM directions

    # Row-tile alignment follows the narrowest activation dtype
    # (f32 -> 8, bf16 -> 16, int8/fp8 -> 32 sublanes).
    def _align(dt):
        return max(8, 32 // jnp.dtype(dt).itemsize)
    row_align = max(_align(in_dtype), _align(out_dtype))

    # Adaptive row tile: big (default 1024) for production N; for moderate N
    # split the rows into >= 2 grid steps so ("parallel",) can shard across the
    # two v7x TensorCores; tiny N collapses to a single aligned block.
    if n >= 64:
        tile = min(tile_n, _round_up(pl.cdiv(n, 2), row_align))
    else:
        tile = _round_up(max(n, 1), row_align)
    tile = max(tile, row_align)

    grid = (pl.cdiv(n, tile),)        # ragged last block handled by Pallas masking

    compute_dtype = jnp.bfloat16 if use_bf16 else jnp.float32
    # Weight cast is tiny (D x D); cache it outside the step loop if weights
    # are static across calls.
    w1c = w1.astype(compute_dtype)
    w2c = w2.astype(compute_dtype)

    # One BlockSpec per embedding piece: rows tiled, feature dim whole
    # (last block dim == full array dim, so widths < 128 are legal).
    in_specs = [pl.BlockSpec((tile, ed), lambda i: (i, 0)) for ed in emb_dims]
    in_specs += [
        pl.BlockSpec((d, d), lambda i: (0, 0)),        # W1, VMEM-resident
        pl.BlockSpec((1, d), lambda i: (0, 0)),        # b1 (f32)
        pl.BlockSpec((d, d_out), lambda i: (0, 0)),    # W2, VMEM-resident
        pl.BlockSpec((1, d_out), lambda i: (0, 0)),    # b2 (f32)
    ]
    # TODO(synk): pipeline_mode=pl.Buffered(1) on the four grid-invariant specs
    # + explicit vmem_limit_bytes once match_emb_size / tile pressure v7x VMEM.

    # Advisory cost so XLA can schedule neighbors around this custom call.
    flops = 2 * n * d * (d + d_out) + 3 * n * d
    bytes_accessed = (
        n * d * jnp.dtype(in_dtype).itemsize
        + n * d_out * jnp.dtype(out_dtype).itemsize
        + int(w1c.size) * jnp.dtype(compute_dtype).itemsize
        + int(w2c.size) * jnp.dtype(compute_dtype).itemsize
        + (d + d_out) * 4)
    cost = pl.CostEstimate(flops=int(flops), transcendentals=0,
                           bytes_accessed=int(bytes_accessed))

    out = pl.pallas_call(
        _make_mlp_kernel(tuple(emb_dims), compute_dtype),
        out_shape=jax.ShapeDtypeStruct((n, d_out), out_dtype),
        grid_spec=pltpu.PrefetchScalarGridSpec(
            num_scalar_prefetch=0,
            grid=grid,
            in_specs=in_specs,
            out_specs=pl.BlockSpec((tile, d_out), lambda i: (i, 0)),
        ),
        compiler_params=pltpu.CompilerParams(
            # Row tiles are independent -> megacore-shardable on v7x.
            dimension_semantics=("parallel",)),
        cost_estimate=cost,
    )(*node_embeddings, w1c, b1, w2c, b2)

    return out


if __name__ == "__main__":
    # Module hyperparameters (small, kernel-friendly).
    emb_size = 32
    nlayers = 3
    match_emb_size = (nlayers + 1) * emb_size              # 128
    output_size = 128
    num_nodes = 70      # NOT a tile multiple -> exercises the ragged grid path

    key = jax.random.PRNGKey(0)
    k_emb, k_w1, k_b1, k_w2, k_b2 = jax.random.split(key, 5)

    # List of (nlayers + 1) node-embedding tensors, each (N, emb_size).
    emb_keys = jax.random.split(k_emb, nlayers + 1)
    node_embeddings = [
        jax.random.normal(k, (num_nodes, emb_size), dtype=jnp.float32)
        for k in emb_keys
    ]

    # Deterministic parameter init (PyTorch Linear shapes, stored as (in, out)).
    scale1 = 1.0 / jnp.sqrt(match_emb_size)
    w1 = jax.random.uniform(k_w1, (match_emb_size, match_emb_size),
                            jnp.float32, -scale1, scale1)
    b1 = jax.random.uniform(k_b1, (match_emb_size,), jnp.float32, -scale1, scale1)
    w2 = jax.random.uniform(k_w2, (match_emb_size, output_size),
                            jnp.float32, -scale1, scale1)
    b2 = jax.random.uniform(k_b2, (output_size,), jnp.float32, -scale1, scale1)

    # Pure-JAX reference (same math, no Pallas).
    x_cat = jnp.concatenate(node_embeddings, axis=-1)
    h_ref = x_cat @ w1 + b1[None, :]
    h_ref = jnp.where(h_ref > 0, h_ref, 0.01 * h_ref)
    ref = h_ref @ w2 + b2[None, :]

    # 1) Pure-f32 path: exact semantics, tight tolerance.
    out_f32 = jax.block_until_ready(
        mlp_forward(node_embeddings, w1, b1, w2, b2, use_bf16=False))
    assert out_f32.shape == (num_nodes, output_size)
    assert jnp.allclose(out_f32, ref, atol=1e-4, rtol=1e-4)

    # 2) f32 inputs, bf16 MXU operands (default): looser tolerance.
    out_mix = jax.block_until_ready(
        mlp_forward(node_embeddings, w1, b1, w2, b2, use_bf16=True))
    assert out_mix.shape == (num_nodes, output_size)
    assert jnp.allclose(out_mix, ref, atol=5e-2, rtol=5e-2)

    # 3) bf16 end-to-end I/O path (what a bf16 producer/consumer would use):
    #    halves activation HBM traffic in both directions.
    emb_bf16 = [e.astype(jnp.bfloat16) for e in node_embeddings]
    out_bf16 = jax.block_until_ready(
        mlp_forward(emb_bf16, w1, b1, w2, b2, use_bf16=True))
    assert out_bf16.shape == (num_nodes, output_size)
    assert out_bf16.dtype == jnp.bfloat16
    assert jnp.allclose(out_bf16.astype(jnp.float32), ref, atol=1e-1, rtol=1e-1)

    print("KERNEL_OK")
</pallas_src>

<mosaic_0001>
module attributes {stable_mosaic.version = 11 : i64} {
  func.func @kernel(%arg0: i32, %arg1: memref<40x32xf32, #tpu.memory_space<vmem>>, %arg2: memref<40x32xf32, #tpu.memory_space<vmem>>, %arg3: memref<40x32xf32, #tpu.memory_space<vmem>>, %arg4: memref<40x32xf32, #tpu.memory_space<vmem>>, %arg5: memref<128x128xf32, #tpu.memory_space<vmem>>, %arg6: memref<1x128xf32, #tpu.memory_space<vmem>>, %arg7: memref<128x128xf32, #tpu.memory_space<vmem>>, %arg8: memref<1x128xf32, #tpu.memory_space<vmem>>, %arg9: memref<40x128xf32, #tpu.memory_space<vmem>>) attributes {dimension_semantics = [#tpu.dimension_semantics<parallel>], iteration_bounds = array<i64: 2>, scalar_prefetch = 0 : i64, scratch_operands = 0 : i64, tpu.core_type = #tpu.core_type<tc>, window_params = [{transform_indices = @transform_0, window_bounds = array<i64: 40, 32>}, {transform_indices = @transform_1, window_bounds = array<i64: 40, 32>}, {transform_indices = @transform_2, window_bounds = array<i64: 40, 32>}, {transform_indices = @transform_3, window_bounds = array<i64: 40, 32>}, {pipeline_mode = #tpu.pipeline_mode<synchronous>, transform_indices = @transform_4, window_bounds = array<i64: 128, 128>}, {pipeline_mode = #tpu.pipeline_mode<synchronous>, transform_indices = @transform_5, window_bounds = array<i64: 1, 128>}, {pipeline_mode = #tpu.pipeline_mode<synchronous>, transform_indices = @transform_6, window_bounds = array<i64: 128, 128>}, {pipeline_mode = #tpu.pipeline_mode<synchronous>, transform_indices = @transform_7, window_bounds = array<i64: 1, 128>}, {transform_indices = @transform_8, window_bounds = array<i64: 40, 128>}]} {
    %c0 = arith.constant 0 : index
    %c0_0 = arith.constant 0 : index
    %0 = vector.load %arg1[%c0, %c0_0] : memref<40x32xf32, #tpu.memory_space<vmem>>, vector<40x32xf32>
    %c0_1 = arith.constant 0 : index
    %c0_2 = arith.constant 0 : index
    %1 = vector.load %arg5[%c0_1, %c0_2] : memref<128x128xf32, #tpu.memory_space<vmem>>, vector<32x128xf32>
    %cst = arith.constant dense<0.000000e+00> : vector<40x128xf32>
    %2 = tpu.matmul %0, %1, %cst {dimension_numbers = #tpu.dot_dimension_numbers<[1], [0], [0], [1], [0, 0, 1, 1], [], []>} : vector<40x32xf32>, vector<32x128xf32>, vector<40x128xf32> -> vector<40x128xf32>
    %c0_3 = arith.constant 0 : index
    %c0_4 = arith.constant 0 : index
    %3 = vector.load %arg2[%c0_3, %c0_4] : memref<40x32xf32, #tpu.memory_space<vmem>>, vector<40x32xf32>
    %c32 = arith.constant 32 : index
    %c0_5 = arith.constant 0 : index
    %4 = vector.load %arg5[%c32, %c0_5] : memref<128x128xf32, #tpu.memory_space<vmem>>, vector<32x128xf32>
    %cst_6 = arith.constant dense<0.000000e+00> : vector<40x128xf32>
    %5 = tpu.matmul %3, %4, %cst_6 {dimension_numbers = #tpu.dot_dimension_numbers<[1], [0], [0], [1], [0, 0, 1, 1], [], []>} : vector<40x32xf32>, vector<32x128xf32>, vector<40x128xf32> -> vector<40x128xf32>
    %6 = arith.addf %2, %5 : vector<40x128xf32>
    %c0_7 = arith.constant 0 : index
    %c0_8 = arith.constant 0 : index
    %7 = vector.load %arg3[%c0_7, %c0_8] : memref<40x32xf32, #tpu.memory_space<vmem>>, vector<40x32xf32>
    %c64 = arith.constant 64 : index
    %c0_9 = arith.constant 0 : index
    %8 = vector.load %arg5[%c64, %c0_9] : memref<128x128xf32, #tpu.memory_space<vmem>>, vector<32x128xf32>
    %cst_10 = arith.constant dense<0.000000e+00> : vector<40x128xf32>
    %9 = tpu.matmul %7, %8, %cst_10 {dimension_numbers = #tpu.dot_dimension_numbers<[1], [0], [0], [1], [0, 0, 1, 1], [], []>} : vector<40x32xf32>, vector<32x128xf32>, vector<40x128xf32> -> vector<40x128xf32>
    %10 = arith.addf %6, %9 : vector<40x128xf32>
    %c0_11 = arith.constant 0 : index
    %c0_12 = arith.constant 0 : index
    %11 = vector.load %arg4[%c0_11, %c0_12] : memref<40x32xf32, #tpu.memory_space<vmem>>, vector<40x32xf32>
    %c96 = arith.constant 96 : index
    %c0_13 = arith.constant 0 : index
    %12 = vector.load %arg5[%c96, %c0_13] : memref<128x128xf32, #tpu.memory_space<vmem>>, vector<32x128xf32>
    %cst_14 = arith.constant dense<0.000000e+00> : vector<40x128xf32>
    %13 = tpu.matmul %11, %12, %cst_14 {dimension_numbers = #tpu.dot_dimension_numbers<[1], [0], [0], [1], [0, 0, 1, 1], [], []>} : vector<40x32xf32>, vector<32x128xf32>, vector<40x128xf32> -> vector<40x128xf32>
    %14 = arith.addf %10, %13 : vector<40x128xf32>
    %c0_15 = arith.constant 0 : index
    %c0_16 = arith.constant 0 : index
    %15 = vector.load %arg6[%c0_15, %c0_16] : memref<1x128xf32, #tpu.memory_space<vmem>>, vector<1x128xf32>
    %16 = vector.broadcast %15 : vector<1x128xf32> to vector<40x128xf32>
    %17 = arith.addf %14, %16 : vector<40x128xf32>
    %cst_17 = arith.constant 0.000000e+00 : f32
    %18 = vector.broadcast %cst_17 : f32 to vector<40x128xf32>
    %19 = arith.cmpf ogt, %17, %18 : vector<40x128xf32>
    %cst_18 = arith.constant 0.00999999977 : f32
    %20 = vector.broadcast %cst_18 : f32 to vector<40x128xf32>
    %21 = arith.mulf %20, %17 : vector<40x128xf32>
    %22 = arith.select %19, %17, %21 : vector<40x128xi1>, vector<40x128xf32>
    %c0_19 = arith.constant 0 : index
    %c0_20 = arith.constant 0 : index
    %23 = vector.load %arg7[%c0_19, %c0_20] : memref<128x128xf32, #tpu.memory_space<vmem>>, vector<128x128xf32>
    %cst_21 = arith.constant dense<0.000000e+00> : vector<40x128xf32>
    %24 = tpu.matmul %22, %23, %cst_21 {dimension_numbers = #tpu.dot_dimension_numbers<[1], [0], [0], [1], [0, 0, 1, 1], [], []>} : vector<40x128xf32>, vector<128x128xf32>, vector<40x128xf32> -> vector<40x128xf32>
    %c0_22 = arith.constant 0 : index
    %c0_23 = arith.constant 0 : index
    %25 = vector.load %arg8[%c0_22, %c0_23] : memref<1x128xf32, #tpu.memory_space<vmem>>, vector<1x128xf32>
    %26 = vector.broadcast %25 : vector<1x128xf32> to vector<40x128xf32>
    %27 = arith.addf %24, %26 : vector<40x128xf32>
    %c0_24 = arith.constant 0 : index
    %c0_25 = arith.constant 0 : index
    %28 = vector.load %arg9[%c0_24, %c0_25] : memref<40x128xf32, #tpu.memory_space<vmem>>, vector<40x128xf32>
    tpu.vector_store %arg9[%c0_24, %c0_25], %27 {strides = array<i32>} : memref<40x128xf32, #tpu.memory_space<vmem>>, vector<40x128xf32>,
    return
  }
  func.func @transform_0(%arg0: i32) -> (i32, i32) {
    %c0_i32 = arith.constant 0 : i32
    %c0_i32_0 = arith.constant 0 : i32
    return %arg0, %c0_i32 : i32, i32
  }
  func.func @transform_1(%arg0: i32) -> (i32, i32) {
    %c0_i32 = arith.constant 0 : i32
    %c0_i32_0 = arith.constant 0 : i32
    return %arg0, %c0_i32 : i32, i32
  }
  func.func @transform_2(%arg0: i32) -> (i32, i32) {
    %c0_i32 = arith.constant 0 : i32
    %c0_i32_0 = arith.constant 0 : i32
    return %arg0, %c0_i32 : i32, i32
  }
  func.func @transform_3(%arg0: i32) -> (i32, i32) {
    %c0_i32 = arith.constant 0 : i32
    %c0_i32_0 = arith.constant 0 : i32
    return %arg0, %c0_i32 : i32, i32
  }
  func.func @transform_4(%arg0: i32) -> (i32, i32) {
    %c0_i32 = arith.constant 0 : i32
    %c0_i32_0 = arith.constant 0 : i32
    %c0_i32_1 = arith.constant 0 : i32
    return %c0_i32, %c0_i32_0 : i32, i32
  }
  func.func @transform_5(%arg0: i32) -> (i32, i32) {
    %c0_i32 = arith.constant 0 : i32
    %c0_i32_0 = arith.constant 0 : i32
    %c0_i32_1 = arith.constant 0 : i32
    return %c0_i32, %c0_i32_0 : i32, i32
  }
  func.func @transform_6(%arg0: i32) -> (i32, i32) {
    %c0_i32 = arith.constant 0 : i32
    %c0_i32_0 = arith.constant 0 : i32
    %c0_i32_1 = arith.constant 0 : i32
    return %c0_i32, %c0_i32_0 : i32, i32
  }
  func.func @transform_7(%arg0: i32) -> (i32, i32) {
    %c0_i32 = arith.constant 0 : i32
    %c0_i32_0 = arith.constant 0 : i32
    %c0_i32_1 = arith.constant 0 : i32
    return %c0_i32, %c0_i32_0 : i32, i32
  }
  func.func @transform_8(%arg0: i32) -> (i32, i32) {
    %c0_i32 = arith.constant 0 : i32
    %c0_i32_0 = arith.constant 0 : i32
    return %arg0, %c0_i32 : i32, i32
  }
}

</mosaic_0001>

<llo_original>
// kernel: tpu_custom_call.1
$region0: #{tpu_custom_call.1}
  #allocation0 [shape = 'u32[]', space=smem, size = 0x4, offset = 0x4, fixed_abs, tag = 'smem constant byte address 0x4 - core index']
  #allocation1 [shape = 'u32[72,128]{1,0:T(1,128)}', space=vmem, size = 0x9000, scoped, tag = 'internal scratch']
  %s0 = inlined_call_operand.vmem [shape: f32[70,32], index: 0, kind: input, shape index: {}]
  %s1 = inlined_call_operand.vmem [shape: f32[70,32], index: 1, kind: input, shape index: {}]
  %s2 = inlined_call_operand.vmem [shape: f32[70,32], index: 2, kind: input, shape index: {}]
  %s3 = inlined_call_operand.vmem [shape: f32[70,32], index: 3, kind: input, shape index: {}]
  %s4 = inlined_call_operand.vmem [shape: f32[128,128], index: 4, kind: input, shape index: {}]
  %s5 = inlined_call_operand.vmem [shape: f32[1,128], index: 5, kind: input, shape index: {}]
  %s6 = inlined_call_operand.vmem [shape: f32[128,128], index: 6, kind: input, shape index: {}]
  %s7 = inlined_call_operand.vmem [shape: f32[1,128], index: 7, kind: input, shape index: {}]
  %s8 = inlined_call_operand.hbm [shape: f32[70,128], index: 8, kind: output, shape index: {}]
  %s9 = sld [smem:[#allocation0]]
  $region65: #{tpu_custom_call.1} parent=0
    _
  %s11 = ssub.s32 1, %s9
  %s12 = scalar_select 0, %s11, %s9
  $region1: #{tpu_custom_call.1} parent=0
    #allocation2 [shape = 'u8[40960]{0}', space=vmem, size = 0xa000, scoped, tag = 'output window, operand 0']
    #allocation3 [shape = 's32[2]{0}', space=sflag, size = 0x8, scoped, tag = 'scoped memory for tpu_custom_call.1']
    %13 = vsyncpa [#allocation3], 0
    %s14 = scalar_lea.sflag [#allocation3], 1
    %15 = vsyncpa %s14, 0
    loop: start=0, step=1, limit=4
    $region2: #{tpu_custom_call.1} parent=1 // loop_pre_header
      _
    $region3: #{tpu_custom_call.1} parent=1 // loop_header
      %s17 = sphi 0, %s21
      %p18 = scmp.ge.s32.totalorder %s17, 4
      %s27 = sphi 0, %s29
      %s30 = sphi 0, %s27
      %s31 = sphi 0, %s30
      %s47 = sphi 0, %s31
      %s53 = sphi 0, %s55
      %s56 = sphi 0, %s53
      %s57 = sphi 0, %s56
      %s73 = sphi 0, %s57
      %s79 = sphi 0, %s81
      %s82 = sphi 0, %s79
      %s83 = sphi 0, %s82
      %s99 = sphi 0, %s83
      %s105 = sphi 0, %s107
      %s108 = sphi 0, %s105
      %s109 = sphi 0, %s108
      %s125 = sphi 0, %s109
      %s129 = sphi 0, %s129
      %s131 = sphi 0, %s129
      %s132 = sphi 0, %s131
      %s146 = sphi 0, %s132
      %s150 = sphi 0, %s150
      %s152 = sphi 0, %s150
      %s153 = sphi 0, %s152
      %s167 = sphi 0, %s153
      %s171 = sphi 0, %s171
      %s173 = sphi 0, %s171
      %s174 = sphi 0, %s173
      %s188 = sphi 0, %s174
      %s192 = sphi 0, %s192
      %s194 = sphi 0, %s192
      %s195 = sphi 0, %s194
      %s209 = sphi 0, %s195
      %s215 = sphi 0, %s217
      %s218 = sphi 0, %s215
      %s219 = sphi 0, %s218
      %s235 = sphi 0, %s219
    $region4: #{tpu_custom_call.1} parent=1 // loop_header_branch
      %20 = sbr.rel (%p18) target = $region8
    $region5: #{tpu_custom_call.1} parent=1 // loop_body
      %s22 = ssub.s32 %s17, 1
      %s23 = ssub.s32 %s17, 2
      %s24 = sadd.s32 %s17, 1
      %s25 = ssub.s32 %s17, %s24
      %p26 = scmp.eq.s32.totalorder %s25, 0
      %s28 = sadd.s32 %s27, 1
      %s29 = scalar_select %p26, %s27, %s28
      %p32 = pneg %p26
      %p33 = scmp.eq.s32.totalorder %s17, 1
      %p34 = por %p32, %p33
      %p35 = scmp.ne.s32.totalorder %s27, %s30
      %p36 = scmp.eq.s32.totalorder %s17, 0
      %p37 = por %p35, %p36
      %p38 = scmp.ne.s32.totalorder %s27, %s30
      %p39 = scmp.eq.s32.totalorder %s22, 1
      %p40 = por %p38, %p39
      %p41 = scmp.ne.s32.totalorder %s30, %s31
      %p42 = scmp.eq.s32.totalorder %s22, 0
      %p43 = por %p41, %p42
      %p44 = scmp.ne.s32.totalorder %s30, %s31
      %p45 = scmp.eq.s32.totalorder %s23, 1
      %p46 = por %p44, %p45
      %p48 = scmp.ne.s32.totalorder %s31, %s47
      %p49 = scmp.eq.s32.totalorder %s23, 0
      %p50 = por %p48, %p49
      %s51 = ssub.s32 %s17, %s24
      %p52 = scmp.eq.s32.totalorder %s51, 0
      %s54 = sadd.s32 %s53, 1
      %s55 = scalar_select %p52, %s53, %s54
      %p58 = pneg %p52
      %p59 = scmp.eq.s32.totalorder %s17, 1
      %p60 = por %p58, %p59
      %p61 = scmp.ne.s32.totalorder %s53, %s56
      %p62 = scmp.eq.s32.totalorder %s17, 0
      %p63 = por %p61, %p62
      %p64 = scmp.ne.s32.totalorder %s53, %s56
      %p65 = scmp.eq.s32.totalorder %s22, 1
      %p66 = por %p64, %p65
      %p67 = scmp.ne.s32.totalorder %s56, %s57
      %p68 = scmp.eq.s32.totalorder %s22, 0
      %p69 = por %p67, %p68
      %p70 = scmp.ne.s32.totalorder %s56, %s57
      %p71 = scmp.eq.s32.totalorder %s23, 1
      %p72 = por %p70, %p71
      %p74 = scmp.ne.s32.totalorder %s57, %s73
      %p75 = scmp.eq.s32.totalorder %s23, 0
      %p76 = por %p74, %p75
      %s77 = ssub.s32 %s17, %s24
      %p78 = scmp.eq.s32.totalorder %s77, 0
      %s80 = sadd.s32 %s79, 1
      %s81 = scalar_select %p78, %s79, %s80
      %p84 = pneg %p78
      %p85 = scmp.eq.s32.totalorder %s17, 1
      %p86 = por %p84, %p85
      %p87 = scmp.ne.s32.totalorder %s79, %s82
      %p88 = scmp.eq.s32.totalorder %s17, 0
      %p89 = por %p87, %p88
      %p90 = scmp.ne.s32.totalorder %s79, %s82
      %p91 = scmp.eq.s32.totalorder %s22, 1
      %p92 = por %p90, %p91
      %p93 = scmp.ne.s32.totalorder %s82, %s83
      %p94 = scmp.eq.s32.totalorder %s22, 0
      %p95 = por %p93, %p94
      %p96 = scmp.ne.s32.totalorder %s82, %s83
      %p97 = scmp.eq.s32.totalorder %s23, 1
      %p98 = por %p96, %p97
      %p100 = scmp.ne.s32.totalorder %s83, %s99
      %p101 = scmp.eq.s32.totalorder %s23, 0
      %p102 = por %p100, %p101
      %s103 = ssub.s32 %s17, %s24
      %p104 = scmp.eq.s32.totalorder %s103, 0
      %s106 = sadd.s32 %s105, 1
      %s107 = scalar_select %p104, %s105, %s106
      %p110 = pneg %p104
      %p111 = scmp.eq.s32.totalorder %s17, 1
      %p112 = por %p110, %p111
      %p113 = scmp.ne.s32.totalorder %s105, %s108
      %p114 = scmp.eq.s32.totalorder %s17, 0
      %p115 = por %p113, %p114
      %p116 = scmp.ne.s32.totalorder %s105, %s108
      %p117 = scmp.eq.s32.totalorder %s22, 1
      %p118 = por %p116, %p117
      %p119 = scmp.ne.s32.totalorder %s108, %s109
      %p120 = scmp.eq.s32.totalorder %s22, 0
      %p121 = por %p119, %p120
      %p122 = scmp.ne.s32.totalorder %s108, %s109
      %p123 = scmp.eq.s32.totalorder %s23, 1
      %p124 = por %p122, %p123
      %p126 = scmp.ne.s32.totalorder %s109, %s125
      %p127 = scmp.eq.s32.totalorder %s23, 0
      %p128 = por %p126, %p127
      %s130 = sadd.s32 %s129, 1
      %p133 = scmp.eq.s32.totalorder %s17, 1
      %p134 = scmp.ne.s32.totalorder %s129, %s131
      %p135 = scmp.eq.s32.totalorder %s17, 0
      %p136 = por %p134, %p135
      %p137 = scmp.ne.s32.totalorder %s129, %s131
      %p138 = scmp.eq.s32.totalorder %s22, 1
      %p139 = por %p137, %p138
      %p140 = scmp.ne.s32.totalorder %s131, %s132
      %p141 = scmp.eq.s32.totalorder %s22, 0
      %p142 = por %p140, %p141
      %p143 = scmp.ne.s32.totalorder %s131, %s132
      %p144 = scmp.eq.s32.totalorder %s23, 1
      %p145 = por %p143, %p144
      %p147 = scmp.ne.s32.totalorder %s132, %s146
      %p148 = scmp.eq.s32.totalorder %s23, 0
      %p149 = por %p147, %p148
      %s151 = sadd.s32 %s150, 1
      %p154 = scmp.eq.s32.totalorder %s17, 1
      %p155 = scmp.ne.s32.totalorder %s150, %s152
      %p156 = scmp.eq.s32.totalorder %s17, 0
      %p157 = por %p155, %p156
      %p158 = scmp.ne.s32.totalorder %s150, %s152
      %p159 = scmp.eq.s32.totalorder %s22, 1
      %p160 = por %p158, %p159
      %p161 = scmp.ne.s32.totalorder %s152, %s153
      %p162 = scmp.eq.s32.totalorder %s22, 0
      %p163 = por %p161, %p162
      %p164 = scmp.ne.s32.totalorder %s152, %s153
      %p165 = scmp.eq.s32.totalorder %s23, 1
      %p166 = por %p164, %p165
      %p168 = scmp.ne.s32.totalorder %s153, %s167
      %p169 = scmp.eq.s32.totalorder %s23, 0
      %p170 = por %p168, %p169
      %s172 = sadd.s32 %s171, 1
      %p175 = scmp.eq.s32.totalorder %s17, 1
      %p176 = scmp.ne.s32.totalorder %s171, %s173
      %p177 = scmp.eq.s32.totalorder %s17, 0
      %p178 = por %p176, %p177
      %p179 = scmp.ne.s32.totalorder %s171, %s173
      %p180 = scmp.eq.s32.totalorder %s22, 1
      %p181 = por %p179, %p180
      %p182 = scmp.ne.s32.totalorder %s173, %s174
      %p183 = scmp.eq.s32.totalorder %s22, 0
      %p184 = por %p182, %p183
      %p185 = scmp.ne.s32.totalorder %s173, %s174
      %p186 = scmp.eq.s32.totalorder %s23, 1
      %p187 = por %p185, %p186
      %p189 = scmp.ne.s32.totalorder %s174, %s188
      %p190 = scmp.eq.s32.totalorder %s23, 0
      %p191 = por %p189, %p190
      %s193 = sadd.s32 %s192, 1
      %p196 = scmp.eq.s32.totalorder %s17, 1
      %p197 = scmp.ne.s32.totalorder %s192, %s194
      %p198 = scmp.eq.s32.totalorder %s17, 0
      %p199 = por %p197, %p198
      %p200 = scmp.ne.s32.totalorder %s192, %s194
      %p201 = scmp.eq.s32.totalorder %s22, 1
      %p202 = por %p200, %p201
      %p203 = scmp.ne.s32.totalorder %s194, %s195
      %p204 = scmp.eq.s32.totalorder %s22, 0
      %p205 = por %p203, %p204
      %p206 = scmp.ne.s32.totalorder %s194, %s195
      %p207 = scmp.eq.s32.totalorder %s23, 1
      %p208 = por %p206, %p207
      %p210 = scmp.ne.s32.totalorder %s195, %s209
      %p211 = scmp.eq.s32.totalorder %s23, 0
      %p212 = por %p210, %p211
      %s213 = ssub.s32 %s17, %s24
      %p214 = scmp.eq.s32.totalorder %s213, 0
      %s216 = sadd.s32 %s215, 1
      %s217 = scalar_select %p214, %s215, %s216
      %p220 = pneg %p214
      %p221 = scmp.eq.s32.totalorder %s17, 1
      %p222 = por %p220, %p221
      %p223 = scmp.ne.s32.totalorder %s215, %s218
      %p224 = scmp.eq.s32.totalorder %s17, 0
      %p225 = por %p223, %p224
      %p226 = scmp.ne.s32.totalorder %s215, %s218
      %p227 = scmp.eq.s32.totalorder %s22, 1
      %p228 = por %p226, %p227
      %p229 = scmp.ne.s32.totalorder %s218, %s219
      %p230 = scmp.eq.s32.totalorder %s22, 0
      %p231 = por %p229, %p230
      %p232 = scmp.ne.s32.totalorder %s218, %s219
      %p233 = scmp.eq.s32.totalorder %s23, 1
      %p234 = por %p232, %p233
      %p236 = scmp.ne.s32.totalorder %s219, %s235
      %p237 = scmp.eq.s32.totalorder %s23, 0
      %p238 = por %p236, %p237
      %p239 = scmp.le.s32.totalorder 1, %s17
      %p240 = scmp.lt.s32.totalorder %s17, 3
      %p241 = pnand %p239, %p240
      %p242 = pneg %p241
      // Predicated region
      $region9: #{tpu_custom_call.1} parent=5 // pred_check
        _
      $region10: #{tpu_custom_call.1} parent=5 // pred_check_branch
        %244 = sbr.rel (%p241) target = $region12
      $region11: #{tpu_custom_call.1} parent=5 // pred_region
        %s245 = ssub.s32 %s17, 1
        // Predicated region
        $region13: #{tpu_custom_call.1} parent=11 // pred_check
          %p246 = pneg %p142
        $region14: #{tpu_custom_call.1} parent=11 // pred_check_branch
          %248 = sbr.rel (%p246) target = $region16
        $region15: #{tpu_custom_call.1} parent=11 // pred_region
          _
        $region16: #{tpu_custom_call.1} parent=11 // pred_fallthru
          _
        // Predicated region
        $region17: #{tpu_custom_call.1} parent=11 // pred_check
          %p249 = pneg %p163
        $region18: #{tpu_custom_call.1} parent=11 // pred_check_branch
          %251 = sbr.rel (%p249) target = $region20
        $region19: #{tpu_custom_call.1} parent=11 // pred_region
          _
        $region20: #{tpu_custom_call.1} parent=11 // pred_fallthru
          _
        // Predicated region
        $region21: #{tpu_custom_call.1} parent=11 // pred_check
          %p252 = pneg %p184
        $region22: #{tpu_custom_call.1} parent=11 // pred_check_branch
          %254 = sbr.rel (%p252) target = $region24
        $region23: #{tpu_custom_call.1} parent=11 // pred_region
          _
        $region24: #{tpu_custom_call.1} parent=11 // pred_fallthru
          _
        // Predicated region
        $region25: #{tpu_custom_call.1} parent=11 // pred_check
          %p255 = pneg %p205
        $region26: #{tpu_custom_call.1} parent=11 // pred_check_branch
          %257 = sbr.rel (%p255) target = $region28
        $region27: #{tpu_custom_call.1} parent=11 // pred_region
          _
        $region28: #{tpu_custom_call.1} parent=11 // pred_fallthru
          _
      $region12: #{tpu_custom_call.1} parent=5 // pred_fallthru
        _
      %p258 = scmp.lt.s32.totalorder %s17, 2
      // Predicated region
      $region29: #{tpu_custom_call.1} parent=5 // pred_check
        %p259 = pneg %p258
      $region30: #{tpu_custom_call.1} parent=5 // pred_check_branch
        %261 = sbr.rel (%p259) target = $region32
      $region31: #{tpu_custom_call.1} parent=5 // pred_region
        // Predicated region
        $region33: #{tpu_custom_call.1} parent=31 // pred_check
          %p262 = pneg %p37
        $region34: #{tpu_custom_call.1} parent=31 // pred_check_branch
          %264 = sbr.rel (%p262) target = $region36
        $region35: #{tpu_custom_call.1} parent=31 // pred_region
          %s265 = smul.u32 5, %s17
          %s266 = ssub.s32 9, %s265
          %p267 = scmp.lt.s32.totalorder %s266, 5
          %s268 = scalar_select %p267, %s266, 5
          %s269 = smul.u32 8, %s268
          %p270 = scmp.lt.s32.totalorder %s265, 8
          %s271 = scalar_select %p270, %s265, 8
          %s272 = smul.addr %s271, 8
          %s273 = scalar_lea.vmem %s0, %s272
          %s274 = smul.u32 5, %s17
          %s275 = ssub.s32 9, %s274
          %p276 = scmp.lt.s32.totalorder %s275, 5
          %s277 = scalar_select %p276, %s275, 5
          %s278 = smul.u32 8, %s277
        $region36: #{tpu_custom_call.1} parent=31 // pred_fallthru
          _
        // Predicated region
        $region37: #{tpu_custom_call.1} parent=31 // pred_check
          %p279 = pneg %p63
        $region38: #{tpu_custom_call.1} parent=31 // pred_check_branch
          %281 = sbr.rel (%p279) target = $region40
        $region39: #{tpu_custom_call.1} parent=31 // pred_region
          %s282 = smul.u32 5, %s17
          %s283 = ssub.s32 9, %s282
          %p284 = scmp.lt.s32.totalorder %s283, 5
          %s285 = scalar_select %p284, %s283, 5
          %s286 = smul.u32 8, %s285
          %p287 = scmp.lt.s32.totalorder %s282, 8
          %s288 = scalar_select %p287, %s282, 8
          %s289 = smul.addr %s288, 8
          %s290 = scalar_lea.vmem %s1, %s289
          %s291 = smul.u32 5, %s17
          %s292 = ssub.s32 9, %s291
          %p293 = scmp.lt.s32.totalorder %s292, 5
          %s294 = scalar_select %p293, %s292, 5
          %s295 = smul.u32 8, %s294
        $region40: #{tpu_custom_call.1} parent=31 // pred_fallthru
          _
        // Predicated region
        $region41: #{tpu_custom_call.1} parent=31 // pred_check
          %p296 = pneg %p89
        $region42: #{tpu_custom_call.1} parent=31 // pred_check_branch
          %298 = sbr.rel (%p296) target = $region44
        $region43: #{tpu_custom_call.1} parent=31 // pred_region
          %s299 = smul.u32 5, %s17
          %s300 = ssub.s32 9, %s299
          %p301 = scmp.lt.s32.totalorder %s300, 5
          %s302 = scalar_select %p301, %s300, 5
          %s303 = smul.u32 8, %s302
          %p304 = scmp.lt.s32.totalorder %s299, 8
          %s305 = scalar_select %p304, %s299, 8
          %s306 = smul.addr %s305, 8
          %s307 = scalar_lea.vmem %s2, %s306
          %s308 = smul.u32 5, %s17
          %s309 = ssub.s32 9, %s308
          %p310 = scmp.lt.s32.totalorder %s309, 5
          %s311 = scalar_select %p310, %s309, 5
          %s312 = smul.u32 8, %s311
        $region44: #{tpu_custom_call.1} parent=31 // pred_fallthru
          _
        // Predicated region
        $region45: #{tpu_custom_call.1} parent=31 // pred_check
          %p313 = pneg %p115
        $region46: #{tpu_custom_call.1} parent=31 // pred_check_branch
          %315 = sbr.rel (%p313) target = $region48
        $region47: #{tpu_custom_call.1} parent=31 // pred_region
          %s316 = smul.u32 5, %s17
          %s317 = ssub.s32 9, %s316
          %p318 = scmp.lt.s32.totalorder %s317, 5
          %s319 = scalar_select %p318, %s317, 5
          %s320 = smul.u32 8, %s319
          %p321 = scmp.lt.s32.totalorder %s316, 8
          %s322 = scalar_select %p321, %s316, 8
          %s323 = smul.addr %s322, 8
          %s324 = scalar_lea.vmem %s3, %s323
          %s325 = smul.u32 5, %s17
          %s326 = ssub.s32 9, %s325
          %p327 = scmp.lt.s32.totalorder %s326, 5
          %s328 = scalar_select %p327, %s326, 5
          %s329 = smul.u32 8, %s328
        $region48: #{tpu_custom_call.1} parent=31 // pred_fallthru
          _
      $region32: #{tpu_custom_call.1} parent=5 // pred_fallthru
        _
      %p330 = scmp.le.s32.totalorder 1, %s17
      %p331 = scmp.lt.s32.totalorder %s17, 3
      %p332 = pnand %p330, %p331
      %p333 = pneg %p332
      // Predicated region
      $region49: #{tpu_custom_call.1} parent=5 // pred_check
        _
      $region50: #{tpu_custom_call.1} parent=5 // pred_check_branch
        %335 = sbr.rel (%p332) target = $region52
      $region51: #{tpu_custom_call.1} parent=5 // pred_region
        %s336 = ssub.s32 %s17, 1
        %s337 = smul.u32 5, %s22
        %s338 = ssub.s32 9, %s337
        %p339 = scmp.lt.s32.totalorder %s338, 5
        %s340 = scalar_select %p339, %s338, 5
        %s341 = smul.u32 8, %s340
        %p342 = scmp.lt.s32.totalorder %s337, 8
        %s343 = scalar_select %p342, %s337, 8
        %s344 = smul.addr %s343, 8
        %s345 = scalar_lea.vmem %s0, %s344
        %p346 = pneg %p43
        %p347 = pneg %p40
        %s348 = smul.u32 5, %s22
        %s349 = ssub.s32 9, %s348
        %p350 = scmp.lt.s32.totalorder %s349, 5
        %s351 = scalar_select %p350, %s349, 5
        %s352 = smul.u32 8, %s351
        %p353 = scmp.lt.s32.totalorder %s348, 8
        %s354 = scalar_select %p353, %s348, 8
        %s355 = smul.addr %s354, 8
        %s356 = scalar_lea.vmem %s1, %s355
        %p357 = pneg %p69
        %p358 = pneg %p66
        %s359 = smul.u32 5, %s22
        %s360 = ssub.s32 9, %s359
        %p361 = scmp.lt.s32.totalorder %s360, 5
        %s362 = scalar_select %p361, %s360, 5
        %s363 = smul.u32 8, %s362
        %p364 = scmp.lt.s32.totalorder %s359, 8
        %s365 = scalar_select %p364, %s359, 8
        %s366 = smul.addr %s365, 8
        %s367 = scalar_lea.vmem %s2, %s366
        %p368 = pneg %p95
        %p369 = pneg %p92
        %s370 = smul.u32 5, %s22
        %s371 = ssub.s32 9, %s370
        %p372 = scmp.lt.s32.totalorder %s371, 5
        %s373 = scalar_select %p372, %s371, 5
        %s374 = smul.u32 8, %s373
        %p375 = scmp.lt.s32.totalorder %s370, 8
        %s376 = scalar_select %p375, %s370, 8
        %s377 = smul.addr %s376, 8
        %s378 = scalar_lea.vmem %s3, %s377
        %p379 = pneg %p121
        %p380 = pneg %p118
        %p381 = pneg %p142
        %p382 = pneg %p139
        %p383 = pneg %p163
        %p384 = pneg %p160
        %p385 = pneg %p184
        %p386 = pneg %p181
        %p387 = pneg %p205
        %p388 = pneg %p202
        %p389 = pneg %p231
        %p390 = pneg %p228
        %s391 = sand.u32 %s218, 1
        %s392 = scalar_lea.sflag [#allocation3], %s391
        %s393 = sand.u32 %s218, 1
        %s394 = smul.addr %s393, 40
        %s395 = scalar_lea.vmem [#allocation2], %s394
        %s396 = smul.u32 5, %s22
        %s397 = ssub.s32 9, %s396
        %p398 = scmp.lt.s32.totalorder %s397, 5
        %s399 = scalar_select %p398, %s397, 5
        %s400 = smul.u32 8, %s399
        %p401 = scmp.lt.s32.totalorder %s396, 8
        %s402 = scalar_select %p401, %s396, 8
        %s403 = smul.addr %s402, 8
        %s404 = scalar_lea.vmem %s0, %s403
        %s405 = smul.u32 5, %s22
        %s406 = ssub.s32 9, %s405
        %p407 = scmp.lt.s32.totalorder %s406, 5
        %s408 = scalar_select %p407, %s406, 5
        %s409 = smul.u32 8, %s408
        %s410 = smul.u32 5, %s22
        %s411 = ssub.s32 9, %s410
        %p412 = scmp.lt.s32.totalorder %s411, 5
        %s413 = scalar_select %p412, %s411, 5
        %s414 = smul.u32 8, %s413
        %p415 = scmp.lt.s32.totalorder %s410, 8
        %s416 = scalar_select %p415, %s410, 8
        %s417 = smul.addr %s416, 8
        %s418 = scalar_lea.vmem %s1, %s417
        %s419 = smul.u32 5, %s22
        %s420 = ssub.s32 9, %s419
        %p421 = scmp.lt.s32.totalorder %s420, 5
        %s422 = scalar_select %p421, %s420, 5
        %s423 = smul.u32 8, %s422
        %s424 = smul.u32 5, %s22
        %s425 = ssub.s32 9, %s424
        %p426 = scmp.lt.s32.totalorder %s425, 5
        %s427 = scalar_select %p426, %s425, 5
        %s428 = smul.u32 8, %s427
        %p429 = scmp.lt.s32.totalorder %s424, 8
        %s430 = scalar_select %p429, %s424, 8
        %s431 = smul.addr %s430, 8
        %s432 = scalar_lea.vmem %s2, %s431
        %s433 = smul.u32 5, %s22
        %s434 = ssub.s32 9, %s433
        %p435 = scmp.lt.s32.totalorder %s434, 5
        %s436 = scalar_select %p435, %s434, 5
        %s437 = smul.u32 8, %s436
        %s438 = smul.u32 5, %s22
        %s439 = ssub.s32 9, %s438
        %p440 = scmp.lt.s32.totalorder %s439, 5
        %s441 = scalar_select %p440, %s439, 5
        %s442 = smul.u32 8, %s441
        %p443 = scmp.lt.s32.totalorder %s438, 8
        %s444 = scalar_select %p443, %s438, 8
        %s445 = smul.addr %s444, 8
        %s446 = scalar_lea.vmem %s3, %s445
        %s447 = smul.u32 5, %s22
        %s448 = ssub.s32 9, %s447
        %p449 = scmp.lt.s32.totalorder %s448, 5
        %s450 = scalar_select %p449, %s448, 5
        %s451 = smul.u32 8, %s450
        %s452 = smul.u32 5, %s22
        %s453 = ssub.s32 9, %s452
        %p454 = scmp.lt.s32.totalorder %s453, 5
        %s455 = scalar_select %p454, %s453, 5
        %s456 = smul.u32 8, %s455
        %v457 = vld [vmem:[%s404] sm:$0xff]
        %v458 = vld [vmem:[%s404 + $0x8] sm:$0xff]
        %v459 = vld [vmem:[%s404 + $0x10] sm:$0xff]
        %v460 = vld [vmem:[%s404 + $0x18] sm:$0xff]
        %v461 = vld [vmem:[%s404 + $0x20] sm:$0xff]
        %v462 = vld [vmem:[%s4] sm:$0xff]
        %v463 = vld [vmem:[%s4 + $0x8] sm:$0xff]
        %v464 = vld [vmem:[%s4 + $0x10] sm:$0xff]
        %v465 = vld [vmem:[%s4 + $0x18] sm:$0xff]
        %v466 = vld [vmem:[%s418] sm:$0xff]
        %v467 = vld [vmem:[%s418 + $0x8] sm:$0xff]
        %v468 = vld [vmem:[%s418 + $0x10] sm:$0xff]
        %v469 = vld [vmem:[%s418 + $0x18] sm:$0xff]
        %v470 = vld [vmem:[%s418 + $0x20] sm:$0xff]
        %v471 = vld [vmem:[%s4 + $0x20] sm:$0xff]
        %v472 = vld [vmem:[%s4 + $0x28] sm:$0xff]
        %v473 = vld [vmem:[%s4 + $0x30] sm:$0xff]
        %v474 = vld [vmem:[%s4 + $0x38] sm:$0xff]
        %vm475 = vcmask 261120
        %v477 = vsel %vm475, %v466, 0
        %v480 = vsel %vm475, %v467, 0
        %v483 = vsel %vm475, %v468, 0
        %v486 = vsel %vm475, %v469, 0
        %v489 = vsel %vm475, %v470, 0
        %491 = vmatpush.msra.mxu0 0.0
        %492 = vmatpush.msra.mxu0 0.0
        %493 = vmatpush.msra.mxu0 0.0
        %494 = vmatpush.msra.mxu0 0.0
        %495 = vmatpush.msra.mxu0 0.0
        %496 = vmatpush.msra.mxu0 0.0
        %497 = vmatpush.msra.mxu0 0.0
        %498 = vmatpush.msra.mxu0 0.0
        %499 = vmatpush.msra.mxu0 0.0
        %500 = vmatpush.msra.mxu0 0.0
        %501 = vmatpush.msra.mxu0 0.0
        %502 = vmatpush.msra.mxu0 0.0
        %503 = vmatpush.msra.mxu0 %v474
        %504 = vmatpush.msra.mxu0 %v473
        %505 = vmatpush.msra.mxu0 %v472
        %506 = vmatpush.msra.mxu0 %v471
        %507 = vmatmul.f32.gmra.mxu0 %v477
        %v508 = vpop.f32.mrf.mxu0
        %v509 = vadd.f32 0.0, %v508
        %510 = vmatmul.f32.gmra.mxu0 %v480
        %v511 = vpop.f32.mrf.mxu0
        %v512 = vadd.f32 0.0, %v511
        %513 = vmatmul.f32.gmra.mxu0 %v483
        %v514 = vpop.f32.mrf.mxu0
        %v515 = vadd.f32 0.0, %v514
        %516 = vmatmul.f32.gmra.mxu0 %v486
        %v517 = vpop.f32.mrf.mxu0
        %v518 = vadd.f32 0.0, %v517
        %519 = vmatmul.f32.gmra.mxu0 %v489
        %v520 = vpop.f32.mrf.mxu0
        %v521 = vadd.f32 0.0, %v520
        %522 = vdwg.mxu0
        %v524 = vsel %vm475, %v457, 0
        %v527 = vsel %vm475, %v458, 0
        %v530 = vsel %vm475, %v459, 0
        %v533 = vsel %vm475, %v460, 0
        %v536 = vsel %vm475, %v461, 0
        %538 = vmatpush.msra.mxu0 0.0
        %539 = vmatpush.msra.mxu0 0.0
        %540 = vmatpush.msra.mxu0 0.0
        %541 = vmatpush.msra.mxu0 0.0
        %542 = vmatpush.msra.mxu0 0.0
        %543 = vmatpush.msra.mxu0 0.0
        %544 = vmatpush.msra.mxu0 0.0
        %545 = vmatpush.msra.mxu0 0.0
        %546 = vmatpush.msra.mxu0 0.0
        %547 = vmatpush.msra.mxu0 0.0
        %548 = vmatpush.msra.mxu0 0.0
        %549 = vmatpush.msra.mxu0 0.0
        %550 = vmatpush.msra.mxu0 %v465
        %551 = vmatpush.msra.mxu0 %v464
        %552 = vmatpush.msra.mxu0 %v463
        %553 = vmatpush.msra.mxu0 %v462
        %554 = vmatmul.f32.gmra.mxu0 %v524
        %v555 = vpop.f32.mrf.mxu0
        %v556 = vadd.f32 %v509, %v555
        %557 = vmatmul.f32.gmra.mxu0 %v527
        %v558 = vpop.f32.mrf.mxu0
        %v559 = vadd.f32 %v512, %v558
        %560 = vmatmul.f32.gmra.mxu0 %v530
        %v561 = vpop.f32.mrf.mxu0
        %v562 = vadd.f32 %v515, %v561
        %563 = vmatmul.f32.gmra.mxu0 %v533
        %v564 = vpop.f32.mrf.mxu0
        %v565 = vadd.f32 %v518, %v564
        %566 = vmatmul.f32.gmra.mxu0 %v536
        %v567 = vpop.f32.mrf.mxu0
        %v568 = vadd.f32 %v521, %v567
        %569 = vdwg.mxu0
        %v570 = vld [vmem:[%s432] sm:$0xff]
        %v571 = vld [vmem:[%s432 + $0x8] sm:$0xff]
        %v572 = vld [vmem:[%s432 + $0x10] sm:$0xff]
        %v573 = vld [vmem:[%s432 + $0x18] sm:$0xff]
        %v574 = vld [vmem:[%s432 + $0x20] sm:$0xff]
        %v575 = vld [vmem:[%s4 + $0x40] sm:$0xff]
        %v576 = vld [vmem:[%s4 + $0x48] sm:$0xff]
        %v577 = vld [vmem:[%s4 + $0x50] sm:$0xff]
        %v578 = vld [vmem:[%s4 + $0x58] sm:$0xff]
        %v580 = vsel %vm475, %v570, 0
        %v583 = vsel %vm475, %v571, 0
        %v586 = vsel %vm475, %v572, 0
        %v589 = vsel %vm475, %v573, 0
        %v592 = vsel %vm475, %v574, 0
        %594 = vmatpush.msra.mxu0 0.0
        %595 = vmatpush.msra.mxu0 0.0
        %596 = vmatpush.msra.mxu0 0.0
        %597 = vmatpush.msra.mxu0 0.0
        %598 = vmatpush.msra.mxu0 0.0
        %599 = vmatpush.msra.mxu0 0.0
        %600 = vmatpush.msra.mxu0 0.0
        %601 = vmatpush.msra.mxu0 0.0
        %602 = vmatpush.msra.mxu0 0.0
        %603 = vmatpush.msra.mxu0 0.0
        %604 = vmatpush.msra.mxu0 0.0
        %605 = vmatpush.msra.mxu0 0.0
        %606 = vmatpush.msra.mxu0 %v578
        %607 = vmatpush.msra.mxu0 %v577
        %608 = vmatpush.msra.mxu0 %v576
        %609 = vmatpush.msra.mxu0 %v575
        %610 = vmatmul.f32.gmra.mxu0 %v580
        %v611 = vpop.f32.mrf.mxu0
        %v612 = vadd.f32 0.0, %v611
        %613 = vmatmul.f32.gmra.mxu0 %v583
        %v614 = vpop.f32.mrf.mxu0
        %v615 = vadd.f32 0.0, %v614
        %616 = vmatmul.f32.gmra.mxu0 %v586
        %v617 = vpop.f32.mrf.mxu0
        %v618 = vadd.f32 0.0, %v617
        %619 = vmatmul.f32.gmra.mxu0 %v589
        %v620 = vpop.f32.mrf.mxu0
        %v621 = vadd.f32 0.0, %v620
        %622 = vmatmul.f32.gmra.mxu0 %v592
        %v623 = vpop.f32.mrf.mxu0
        %v624 = vadd.f32 0.0, %v623
        %625 = vdwg.mxu0
        %v626 = vadd.f32 %v556, %v612
        %v627 = vadd.f32 %v559, %v615
        %v628 = vadd.f32 %v562, %v618
        %v629 = vadd.f32 %v565, %v621
        %v630 = vadd.f32 %v568, %v624
        %v631 = vld [vmem:[%s446] sm:$0xff]
        %v632 = vld [vmem:[%s446 + $0x8] sm:$0xff]
        %v633 = vld [vmem:[%s446 + $0x10] sm:$0xff]
        %v634 = vld [vmem:[%s446 + $0x18] sm:$0xff]
        %v635 = vld [vmem:[%s446 + $0x20] sm:$0xff]
        %v636 = vld [vmem:[%s4 + $0x60] sm:$0xff]
        %v637 = vld [vmem:[%s4 + $0x68] sm:$0xff]
        %v638 = vld [vmem:[%s4 + $0x70] sm:$0xff]
        %v639 = vld [vmem:[%s4 + $0x78] sm:$0xff]
        %v641 = vsel %vm475, %v631, 0
        %v644 = vsel %vm475, %v632, 0
        %v647 = vsel %vm475, %v633, 0
        %v650 = vsel %vm475, %v634, 0
        %v653 = vsel %vm475, %v635, 0
        %655 = vmatpush.msra.mxu0 0.0
        %656 = vmatpush.msra.mxu0 0.0
        %657 = vmatpush.msra.mxu0 0.0
        %658 = vmatpush.msra.mxu0 0.0
        %659 = vmatpush.msra.mxu0 0.0
        %660 = vmatpush.msra.mxu0 0.0
        %661 = vmatpush.msra.mxu0 0.0
        %662 = vmatpush.msra.mxu0 0.0
        %663 = vmatpush.msra.mxu0 0.0
        %664 = vmatpush.msra.mxu0 0.0
        %665 = vmatpush.msra.mxu0 0.0
        %666 = vmatpush.msra.mxu0 0.0
        %667 = vmatpush.msra.mxu0 %v639
        %668 = vmatpush.msra.mxu0 %v638
        %669 = vmatpush.msra.mxu0 %v637
        %670 = vmatpush.msra.mxu0 %v636
        %671 = vmatmul.f32.gmra.mxu0 %v641
        %v672 = vpop.f32.mrf.mxu0
        %v673 = vadd.f32 0.0, %v672
        %674 = vmatmul.f32.gmra.mxu0 %v644
        %v675 = vpop.f32.mrf.mxu0
        %v676 = vadd.f32 0.0, %v675
        %677 = vmatmul.f32.gmra.mxu0 %v647
        %v678 = vpop.f32.mrf.mxu0
        %v679 = vadd.f32 0.0, %v678
        %680 = vmatmul.f32.gmra.mxu0 %v650
        %v681 = vpop.f32.mrf.mxu0
        %v682 = vadd.f32 0.0, %v681
        %683 = vmatmul.f32.gmra.mxu0 %v653
        %v684 = vpop.f32.mrf.mxu0
        %v685 = vadd.f32 0.0, %v684
        %686 = vdwg.mxu0
        %v687 = vadd.f32 %v626, %v673
        %v688 = vadd.f32 %v627, %v676
        %v689 = vadd.f32 %v628, %v679
        %v690 = vadd.f32 %v629, %v682
        %v691 = vadd.f32 %v630, %v685
        %v692 = vld [vmem:[%s5] sm:$0x1]
        %v694 = vperm.slane %v692, 0
        %v696 = vadd.f32 %v687, %v694
        %v697 = vadd.f32 %v688, %v694
        %v698 = vadd.f32 %v689, %v694
        %v699 = vadd.f32 %v690, %v694
        %v700 = vadd.f32 %v691, %v694
        %vm701 = vcmp.gt.f32.partialorder %v696, 0.0
        %vm702 = vcmp.gt.f32.partialorder %v697, 0.0
        %vm703 = vcmp.gt.f32.partialorder %v698, 0.0
        %vm704 = vcmp.gt.f32.partialorder %v699, 0.0
        %vm705 = vcmp.gt.f32.partialorder %v700, 0.0
        %v706 = vmul.f32 %v696, 0.01
        %v707 = vmul.f32 %v697, 0.01
        %v708 = vmul.f32 %v698, 0.01
        %v709 = vmul.f32 %v699, 0.01
        %v710 = vmul.f32 %v700, 0.01
        %v711 = vsel %vm701, %v696, %v706
        %v712 = vsel %vm702, %v697, %v707
        %v713 = vsel %vm703, %v698, %v708
        %v714 = vsel %vm704, %v699, %v709
        %v715 = vsel %vm705, %v700, %v710
        %v716 = vld [vmem:[%s6] sm:$0xff]
        %v717 = vld [vmem:[%s6 + $0x8] sm:$0xff]
        %v718 = vld [vmem:[%s6 + $0x10] sm:$0xff]
        %v719 = vld [vmem:[%s6 + $0x18] sm:$0xff]
        %v720 = vld [vmem:[%s6 + $0x20] sm:$0xff]
        %v721 = vld [vmem:[%s6 + $0x28] sm:$0xff]
        %v722 = vld [vmem:[%s6 + $0x30] sm:$0xff]
        %v723 = vld [vmem:[%s6 + $0x38] sm:$0xff]
        %v724 = vld [vmem:[%s6 + $0x40] sm:$0xff]
        %v725 = vld [vmem:[%s6 + $0x48] sm:$0xff]
        %v726 = vld [vmem:[%s6 + $0x50] sm:$0xff]
        %v727 = vld [vmem:[%s6 + $0x58] sm:$0xff]
        %v728 = vld [vmem:[%s6 + $0x60] sm:$0xff]
        %v729 = vld [vmem:[%s6 + $0x68] sm:$0xff]
        %v730 = vld [vmem:[%s6 + $0x70] sm:$0xff]
        %v731 = vld [vmem:[%s6 + $0x78] sm:$0xff]
        %v732 = vld [vmem:[%s7] sm:$0x1]
        %v734 = vperm.slane %v732, 0
        %736 = vmatpush.msra.mxu0 %v731
        %737 = vmatpush.msra.mxu0 %v730
        %738 = vmatpush.msra.mxu0 %v729
        %739 = vmatpush.msra.mxu0 %v728
        %740 = vmatpush.msra.mxu0 %v727
        %741 = vmatpush.msra.mxu0 %v726
        %742 = vmatpush.msra.mxu0 %v725
        %743 = vmatpush.msra.mxu0 %v724
        %744 = vmatpush.msra.mxu0 %v723
        %745 = vmatpush.msra.mxu0 %v722
        %746 = vmatpush.msra.mxu0 %v721
        %747 = vmatpush.msra.mxu0 %v720
        %748 = vmatpush.msra.mxu0 %v719
        %749 = vmatpush.msra.mxu0 %v718
        %750 = vmatpush.msra.mxu0 %v717
        %751 = vmatpush.msra.mxu0 %v716
        %752 = vmatmul.f32.gmra.mxu0 %v711
        %v753 = vpop.f32.mrf.mxu0
        %v754 = vadd.f32 %v734, %v753
        %755 = vmatmul.f32.gmra.mxu0 %v712
        %v756 = vpop.f32.mrf.mxu0
        %v757 = vadd.f32 %v734, %v756
        %758 = vmatmul.f32.gmra.mxu0 %v713
        %v759 = vpop.f32.mrf.mxu0
        %v760 = vadd.f32 %v734, %v759
        %761 = vmatmul.f32.gmra.mxu0 %v714
        %v762 = vpop.f32.mrf.mxu0
        %v763 = vadd.f32 %v734, %v762
        %764 = vmatmul.f32.gmra.mxu0 %v715
        %v765 = vpop.f32.mrf.mxu0
        %v766 = vadd.f32 %v734, %v765
        %767 = vdwg.mxu0
        %768 = vst [vmem:[%s395] sm:$0xff] %v754
        %769 = vst [vmem:[%s395 + $0x8] sm:$0xff] %v757
        %770 = vst [vmem:[%s395 + $0x10] sm:$0xff] %v760
        %771 = vst [vmem:[%s395 + $0x18] sm:$0xff] %v763
        %772 = vst [vmem:[%s395 + $0x20] sm:$0xff] %v766
        %s773 = sand.u32 %s218, 1
        %s774 = scalar_lea.sflag [#allocation3], %s773
        %s775 = sand.u32 %s218, 1
        %s776 = smul.addr %s775, 40
        %s777 = scalar_lea.vmem [#allocation2], %s776
        // Predicated region
        $region53: #{tpu_custom_call.1} parent=51 // pred_check
          %p778 = pneg %p228
        $region54: #{tpu_custom_call.1} parent=51 // pred_check_branch
          %780 = sbr.rel (%p778) target = $region56
        $region55: #{tpu_custom_call.1} parent=51 // pred_region
          %s781 = smul.u32 5, %s22
          %s782 = ssub.s32 9, %s781
          %p783 = scmp.lt.s32.totalorder %s782, 5
          %s784 = scalar_select %p783, %s782, 5
          %s785 = smul.u32 8, %s784
          %s786 = ssub.s32 40, %s785
          %s787 = sshll.u32 %s786, 4
          %788 = vsyncadd %s774, %s787
          %p789 = scmp.ne.s32.totalorder 0, %s785
          %s790 = smul.addr %s781, 8
          %s791 = scalar_lea.hbm %s8, %s790
          %s792 = smul.u32 8, %s784
          %s793 = sshll.u32 %s777, 4
          %s794 = int_to_ptr.vmem [resolvable:$true] %s793
          %s795 = sshll.u32 %s791, 4
          %s796 = int_to_ptr.hbm [resolvable:$true] %s795
          %s797 = sshll.u32 %s792, 4
          %801 = dma.vmem_to_hbm [thread:$0]  (%p789), %s794, %s797, %s796, %s774, 128, 128, 8
        $region56: #{tpu_custom_call.1} parent=51 // pred_fallthru
          _
      $region52: #{tpu_custom_call.1} parent=5 // pred_fallthru
        _
      %p802 = scmp.le.s32.totalorder 2, %s17
      // Predicated region
      $region57: #{tpu_custom_call.1} parent=5 // pred_check
        %p803 = pneg %p802
      $region58: #{tpu_custom_call.1} parent=5 // pred_check_branch
        %805 = sbr.rel (%p803) target = $region60
      $region59: #{tpu_custom_call.1} parent=5 // pred_region
        %s806 = ssub.s32 %s17, 2
        // Predicated region
        $region61: #{tpu_custom_call.1} parent=59 // pred_check
          %p807 = pneg %p234
        $region62: #{tpu_custom_call.1} parent=59 // pred_check_branch
          %809 = sbr.rel (%p807) target = $region64
        $region63: #{tpu_custom_call.1} parent=59 // pred_region
          %s810 = sand.u32 %s219, 1
          %s811 = scalar_lea.sflag [#allocation3], %s810
          %s812 = sand.u32 %s219, 1
          %s813 = smul.addr %s812, 40
          %s814 = scalar_lea.vmem [#allocation2], %s813
          %816 = dma.done %s811, 640
        $region64: #{tpu_custom_call.1} parent=59 // pred_fallthru
          _
      $region60: #{tpu_custom_call.1} parent=5 // pred_fallthru
        _
    $region6: #{tpu_custom_call.1} parent=1 // loop_footer
      %s21 = sadd.s32 1, %s17
    $region7: #{tpu_custom_call.1} parent=1 // loop_footer_branch
      %16 = sbr.rel target = $region3
    $region8: #{tpu_custom_call.1} parent=1 // loop_exit
      _
    %817 = vsyncpa [#allocation3], 1
    %s818 = scalar_lea.sflag [#allocation3], 1
    %819 = vsyncpa %s818, 1

</llo_original>
